<compile_context>
chip_gen: v5e
topology: v5e:2x2
jax: 0.10.0
libtpu: 0.0.40
codegen_flags: <defaults>
</compile_context>

<pallas_src>
import jax
import jax.numpy as jnp
from jax.experimental import pallas as pl
from jax.experimental.pallas import tpu as pltpu

LN2 = 0.6931471805599453


def shifted_softplus(x):
    # ssp(x) = softplus(x) - ln2, stable single-branch form.
    return jnp.maximum(x, 0.0) + jnp.log1p(jnp.exp(-jnp.abs(x))) - LN2


def _round_up(v, m):
    return ((v + m - 1) // m) * m


def _tpu_target():
    """Best-effort hardware introspection (generation, VMEM, MXU width, #TCs)."""
    kind = ""
    try:
        kind = jax.devices()[0].device_kind.lower()
    except Exception:
        pass
    if "v7" in kind:
        gen = 7
    elif "v6" in kind:
        gen = 6
    elif "v5" in kind:
        gen = 5
    elif "v4" in kind:
        gen = 4
    else:
        gen = 6
    vmem_cap = (64 if gen >= 7 else 128) * 1024 * 1024
    try:
        vmem_cap = int(pltpu.get_tpu_info().vmem_capacity_bytes)
    except Exception:
        pass
    return dict(
        generation=gen,
        vmem_capacity=vmem_cap,
        mxu_width=256 if gen >= 6 else 128,
        num_tensorcores=2 if gen >= 7 else 1,
        prefer_bf16=gen >= 6,
    )


# ----------------------------------------------------------------------------
# One-time parameter fusion (hoisted out of the forward path)
# ----------------------------------------------------------------------------
def prepare_params(params, *, operand_dtype="auto", mxu_width=None,
                   pad_out_lanes=True):
    """Fuse the T per-tile MLPs into grouped, lane-concatenated weights.

      * layer 1: per-group column concat          -> (G, n_in, Tg*H)
      * layers 2/3: per-group block-diagonal      -> (G, Tg*H, Tg*H / Tg*n_out)
      * -ln2 of shifted_softplus folded into b2/b3 (exact: bias absorbs
        ln2 * colsum(W))
      * group size Tg chosen so Tg*H <= MXU width (128 v5e, 256 v6e/v7x)
      * W3/b3 columns zero-padded to a multiple of 128 lanes (lane-dense stores)
      * MXU operands optionally cast to bf16 ("auto": bf16 on v6e/v7x)
    """
    info = _tpu_target()
    if mxu_width is None:
        mxu_width = info["mxu_width"]
    if operand_dtype == "auto":
        operand_dtype = jnp.bfloat16 if info["prefer_bf16"] else None

    w1, b1 = params["w1"], params["b1"]          # (T, n_in, H), (T, 1, H)
    w2, b2 = params["w2"], params["b2"]          # (T, H, H),    (T, 1, H)
    w3, b3 = params["w3"], params["b3"]          # (T, H, n_out),(T, 1, n_out)
    T, n_in, H = w1.shape
    n_out = w3.shape[-1]

    # Fold the -ln2 shift of the previous layer's activation into this layer's
    # bias:  ssp(z) @ W + b == softplus(z) @ W + (b - ln2 * colsum(W)).
    b2 = b2 - LN2 * jnp.sum(w2, axis=1, keepdims=True)
    b3 = b3 - LN2 * jnp.sum(w3, axis=1, keepdims=True)

    # Tile grouping: Tg tiles fused per MXU pass; pad T up with zero tiles.
    Tg = max(1, min(T, mxu_width // max(H, 1)))
    G = pl.cdiv(T, Tg)
    T_pad = G * Tg
    if T_pad != T:
        pad = T_pad - T
        zpad = lambda a: jnp.pad(a, ((0, pad),) + ((0, 0),) * (a.ndim - 1))
        w1, b1, w2, b2, w3, b3 = [zpad(a) for a in (w1, b1, w2, b2, w3, b3)]

    THg, TOg = Tg * H, Tg * n_out
    # Lane-dense output stores: pad group output width to a multiple of 128.
    # (Required for G > 1 anyway so the output block obeys the (8,128) rule;
    #  for tiny T*n_out the extra HBM write bytes can be traded off via
    #  pad_out_lanes=False when G == 1.)
    TOg_pad = _round_up(TOg, 128) if (pad_out_lanes or G > 1) else TOg

    def cat_cols(a, width):                      # (T_pad,1,w) -> (G,1,Tg*w)
        return a.reshape(G, Tg, 1, width).transpose(0, 2, 1, 3).reshape(
            G, 1, Tg * width)

    w1g = w1.reshape(G, Tg, n_in, H).transpose(0, 2, 1, 3).reshape(G, n_in, THg)
    b1g = cat_cols(b1, H)
    b2g = cat_cols(b2, H)
    b3g = cat_cols(b3, n_out)

    eye = jnp.eye(Tg, dtype=w2.dtype)            # block-diagonal within a group
    w2g = (eye[None, :, None, :, None]
           * w2.reshape(G, Tg, H, H)[:, :, :, None, :]).reshape(G, THg, THg)
    w3g = (eye[None, :, None, :, None]
           * w3.reshape(G, Tg, H, n_out)[:, :, :, None, :]).reshape(G, THg, TOg)

    if TOg_pad != TOg:
        w3g = jnp.pad(w3g, ((0, 0), (0, 0), (0, TOg_pad - TOg)))
        b3g = jnp.pad(b3g, ((0, 0), (0, 0), (0, TOg_pad - TOg)))

    if operand_dtype is not None:                # MXU operands only; biases f32
        w1g = w1g.astype(operand_dtype)
        w2g = w2g.astype(operand_dtype)
        w3g = w3g.astype(operand_dtype)

    bf16_act = (operand_dtype is not None
                and jnp.dtype(operand_dtype) == jnp.dtype(jnp.bfloat16)
                and info["prefer_bf16"])         # keep f32 EUP/VPU path on v5e

    return {
        "w1": w1g, "b1": b1g, "w2": w2g, "b2": b2g, "w3": w3g, "b3": b3g,
        "meta": dict(n_in=n_in, H=H, n_out=n_out, T=T, Tg=Tg, G=G,
                     THg=THg, TOg=TOg, TOg_pad=TOg_pad,
                     operand_dtype=operand_dtype, bf16_act=bf16_act),
    }


# ----------------------------------------------------------------------------
# Kernel
# ----------------------------------------------------------------------------
def _make_kernel(n_groups, bf16_act):
    act_dtype = jnp.bfloat16 if bf16_act else jnp.float32

    def _softplus(z):
        # softplus WITHOUT the -ln2 shift (folded into the next layer's bias).
        z = z.astype(act_dtype)
        pos = jnp.maximum(z, 0.0)
        e = jnp.exp(-jnp.abs(z))
        if bf16_act:
            # bf16 EUP path (v6e/v7x); plain log is exact enough at bf16 precision
            return pos + jnp.log(1.0 + e)
        return pos + jnp.log1p(e)

    def kernel(x_ref, w1_ref, b1_ref, w2_ref, b2_ref, w3_ref, b3_ref, o_ref):
        g = pl.program_id(1) if n_groups > 1 else 0
        x = x_ref[...]                                            # (rb, n_in)
        z1 = jnp.dot(x, w1_ref[g], preferred_element_type=jnp.float32) + b1_ref[g]
        h1 = _softplus(z1)                                        # (rb, THg)
        z2 = jnp.dot(h1, w2_ref[g], preferred_element_type=jnp.float32) + b2_ref[g]
        h2 = _softplus(z2)                                        # (rb, THg)
        y = jnp.dot(h2, w3_ref[g], preferred_element_type=jnp.float32) + b3_ref[g]
        o_ref[...] = y.astype(o_ref.dtype)                        # (rb, TOg_pad)

    return kernel


# ----------------------------------------------------------------------------
# Forward wrapper
# ----------------------------------------------------------------------------
def tiled_multilayer_nn(x, fused, *, row_block=2048):
    """x: (B, A, n_in); fused: prepare_params(...) output. -> (B, A, T*n_out)."""
    meta = fused["meta"]
    n_in, n_out, T = meta["n_in"], meta["n_out"], meta["T"]
    G, THg, TOg, TOg_pad = meta["G"], meta["THg"], meta["TOg"], meta["TOg_pad"]
    operand_dtype = meta["operand_dtype"]

    B, A, n_in_x = x.shape
    assert n_in_x == n_in, (n_in_x, n_in)
    M = B * A

    info = _tpu_target()

    x2 = x.reshape(M, n_in)
    if operand_dtype is not None:
        x2 = x2.astype(operand_dtype)

    # Row blocking: round rb down toward M (minimal padding) and ensure at least
    # one row block per TensorCore so the 'parallel' axis shards on v7x.
    min_blocks = (info["num_tensorcores"]
                  if M >= 8 * info["num_tensorcores"] else 1)
    n_blocks = max(pl.cdiv(M, row_block), min_blocks)
    rb = _round_up(pl.cdiv(M, n_blocks), 8)
    m_pad = n_blocks * rb
    if m_pad != M:
        x2 = jnp.pad(x2, ((0, m_pad - M), (0, 0)))

    # Footprint-derived VMEM limit, capped per generation (<= 75% of physical).
    weight_bytes = sum(int(a.size) * a.dtype.itemsize
                       for k, a in fused.items() if k != "meta")
    need = (weight_bytes
            + 2 * rb * n_in * x2.dtype.itemsize     # x blocks (double-buffered)
            + 2 * rb * TOg_pad * 4                  # output blocks
            + 8 * rb * THg * 4                      # z/h intermediates + slack
            + (8 << 20))                            # headroom
    cap = int(0.75 * info["vmem_capacity"])
    vmem_limit = int(min(max(need, 32 << 20), cap))

    kernel = _make_kernel(G, meta["bf16_act"])

    out = pl.pallas_call(
        kernel,
        out_shape=jax.ShapeDtypeStruct((m_pad, G * TOg_pad), jnp.float32),
        grid=(n_blocks, G),
        in_specs=[
            # activations: pipelined over row blocks
            pl.BlockSpec((rb, n_in), lambda i, g: (i, 0)),
            # fused weights/biases: whole-array VMEM residents (one copy, one
            # fetch — no double-buffering of never-changing operands)
            pl.BlockSpec(memory_space=pltpu.MemorySpace.VMEM),
            pl.BlockSpec(memory_space=pltpu.MemorySpace.VMEM),
            pl.BlockSpec(memory_space=pltpu.MemorySpace.VMEM),
            pl.BlockSpec(memory_space=pltpu.MemorySpace.VMEM),
            pl.BlockSpec(memory_space=pltpu.MemorySpace.VMEM),
            pl.BlockSpec(memory_space=pltpu.MemorySpace.VMEM),
        ],
        out_specs=pl.BlockSpec((rb, TOg_pad), lambda i, g: (i, g)),
        compiler_params=pltpu.CompilerParams(
            dimension_semantics=("parallel", "parallel"),
            vmem_limit_bytes=vmem_limit),
    )(x2, fused["w1"], fused["b1"], fused["w2"], fused["b2"],
      fused["w3"], fused["b3"])                     # (m_pad, G*TOg_pad)

    out = out[:M]
    if TOg_pad != TOg:                              # drop lane padding per group
        out = out.reshape(M, G, TOg_pad)[:, :, :TOg].reshape(M, G * TOg)
    if G * TOg != T * n_out:                        # drop zero-padded tiles
        out = out[:, : T * n_out]
    return out.reshape(B, A, T * n_out)


# ----------------------------------------------------------------------------
# Test harness
# ----------------------------------------------------------------------------
def init_params(key, n_in, n_out, n_tiles, n_hidden):
    ks = jax.random.split(key, 3)

    def xavier(k, shape, fan_in, fan_out):
        lim = (6.0 / (fan_in + fan_out)) ** 0.5
        return jax.random.uniform(k, shape, jnp.float32, -lim, lim)

    return {
        "w1": xavier(ks[0], (n_tiles, n_in, n_hidden), n_in, n_hidden),
        "b1": jnp.zeros((n_tiles, 1, n_hidden), jnp.float32),
        "w2": xavier(ks[1], (n_tiles, n_hidden, n_hidden), n_hidden, n_hidden),
        "b2": jnp.zeros((n_tiles, 1, n_hidden), jnp.float32),
        "w3": xavier(ks[2], (n_tiles, n_hidden, n_out), n_hidden, n_out),
        "b3": jnp.zeros((n_tiles, 1, n_out), jnp.float32),
    }


def reference(x, params):
    """Plain-JAX reference of the PyTorch forward."""
    T = params["w1"].shape[0]
    outs = []
    for t in range(T):
        h1 = shifted_softplus(x @ params["w1"][t] + params["b1"][t])
        h2 = shifted_softplus(h1 @ params["w2"][t] + params["b2"][t])
        outs.append(h2 @ params["w3"][t] + params["b3"][t])
    return jnp.concatenate(outs, axis=2)


if __name__ == "__main__":
    # Small shapes consistent with the module: (batch, n_atoms, n_in)
    B, A = 2, 8
    n_in, n_out, n_tiles, n_hidden = 16, 4, 3, 32

    key = jax.random.PRNGKey(0)
    kx, kp = jax.random.split(key)
    x = jax.random.normal(kx, (B, A, n_in), jnp.float32)
    params = init_params(kp, n_in, n_out, n_tiles, n_hidden)
    y_ref = reference(x, params)

    # 1) exact f32 operand path (matches PyTorch numerics)
    fused_f32 = prepare_params(params, operand_dtype=None)
    y32 = jax.block_until_ready(tiled_multilayer_nn(x, fused_f32))
    assert y32.shape == (B, A, n_tiles * n_out), y32.shape
    assert jnp.allclose(y32, y_ref, atol=1e-4, rtol=1e-4), \
        float(jnp.max(jnp.abs(y32 - y_ref)))

    # 2) generation-tuned default (bf16 MXU operands / bf16 EUP on v6e/v7x)
    fused = prepare_params(params)
    y = jax.block_until_ready(tiled_multilayer_nn(x, fused))
    assert y.shape == (B, A, n_tiles * n_out), y.shape
    assert jnp.allclose(y, y_ref, atol=1e-1, rtol=1e-1), \
        float(jnp.max(jnp.abs(y - y_ref)))

    print("KERNEL_OK")
</pallas_src>

<mosaic_0001>
module attributes {stable_mosaic.version = 11 : i64} {
  func.func @kernel(%arg0: i32, %arg1: i32, %arg2: memref<16x16xf32, #tpu.memory_space<vmem>>, %arg3: memref<1x16x96xf32, #tpu.memory_space<vmem>>, %arg4: memref<1x1x96xf32, #tpu.memory_space<vmem>>, %arg5: memref<1x96x96xf32, #tpu.memory_space<vmem>>, %arg6: memref<1x1x96xf32, #tpu.memory_space<vmem>>, %arg7: memref<1x96x128xf32, #tpu.memory_space<vmem>>, %arg8: memref<1x1x128xf32, #tpu.memory_space<vmem>>, %arg9: memref<16x128xf32, #tpu.memory_space<vmem>>) attributes {dimension_semantics = [#tpu.dimension_semantics<parallel>, #tpu.dimension_semantics<parallel>], iteration_bounds = array<i64: 1, 1>, scalar_prefetch = 0 : i64, scratch_operands = 0 : i64, tpu.core_type = #tpu.core_type<tc>, window_params = [{transform_indices = @transform_0, window_bounds = array<i64: 16, 16>}, {pipeline_mode = #tpu.pipeline_mode<synchronous>, transform_indices = @transform_1, window_bounds = array<i64: 1, 16, 96>}, {pipeline_mode = #tpu.pipeline_mode<synchronous>, transform_indices = @transform_2, window_bounds = array<i64: 1, 1, 96>}, {pipeline_mode = #tpu.pipeline_mode<synchronous>, transform_indices = @transform_3, window_bounds = array<i64: 1, 96, 96>}, {pipeline_mode = #tpu.pipeline_mode<synchronous>, transform_indices = @transform_4, window_bounds = array<i64: 1, 1, 96>}, {pipeline_mode = #tpu.pipeline_mode<synchronous>, transform_indices = @transform_5, window_bounds = array<i64: 1, 96, 128>}, {pipeline_mode = #tpu.pipeline_mode<synchronous>, transform_indices = @transform_6, window_bounds = array<i64: 1, 1, 128>}, {transform_indices = @transform_7, window_bounds = array<i64: 16, 128>}]} {
    %c0 = arith.constant 0 : index
    %c0_0 = arith.constant 0 : index
    %0 = vector.load %arg2[%c0, %c0_0] : memref<16x16xf32, #tpu.memory_space<vmem>>, vector<16x16xf32>
    %c0_1 = arith.constant 0 : index
    %c0_2 = arith.constant 0 : index
    %c0_3 = arith.constant 0 : index
    %1 = vector.load %arg3[%c0_1, %c0_2, %c0_3] : memref<1x16x96xf32, #tpu.memory_space<vmem>>, vector<1x16x96xf32>
    %2 = vector.shape_cast %1 : vector<1x16x96xf32> to vector<16x96xf32>
    %cst = arith.constant dense<0.000000e+00> : vector<16x96xf32>
    %3 = tpu.matmul %0, %2, %cst {dimension_numbers = #tpu.dot_dimension_numbers<[1], [0], [0], [1], [0, 0, 1, 1], [], []>} : vector<16x16xf32>, vector<16x96xf32>, vector<16x96xf32> -> vector<16x96xf32>
    %c0_4 = arith.constant 0 : index
    %c0_5 = arith.constant 0 : index
    %c0_6 = arith.constant 0 : index
    %4 = vector.load %arg4[%c0_4, %c0_5, %c0_6] : memref<1x1x96xf32, #tpu.memory_space<vmem>>, vector<1x1x96xf32>
    %5 = vector.shape_cast %4 : vector<1x1x96xf32> to vector<1x96xf32>
    %6 = vector.broadcast %5 : vector<1x96xf32> to vector<16x96xf32>
    %7 = arith.addf %3, %6 : vector<16x96xf32>
    %cst_7 = arith.constant 0.000000e+00 : f32
    %8 = vector.broadcast %cst_7 : f32 to vector<16x96xf32>
    %9 = arith.maximumf %7, %8 : vector<16x96xf32>
    %10 = math.absf %7 : vector<16x96xf32>
    %cst_8 = arith.constant 0.000000e+00 : f32
    %11 = vector.broadcast %cst_8 : f32 to vector<16x96xf32>
    %12 = arith.subf %11, %10 : vector<16x96xf32>
    %13 = math.exp %12 : vector<16x96xf32>
    %14 = math.log1p %13 : vector<16x96xf32>
    %15 = arith.addf %9, %14 : vector<16x96xf32>
    %c0_9 = arith.constant 0 : index
    %c0_10 = arith.constant 0 : index
    %c0_11 = arith.constant 0 : index
    %16 = vector.load %arg5[%c0_9, %c0_10, %c0_11] : memref<1x96x96xf32, #tpu.memory_space<vmem>>, vector<1x96x96xf32>
    %17 = vector.shape_cast %16 : vector<1x96x96xf32> to vector<96x96xf32>
    %cst_12 = arith.constant dense<0.000000e+00> : vector<16x96xf32>
    %18 = tpu.matmul %15, %17, %cst_12 {dimension_numbers = #tpu.dot_dimension_numbers<[1], [0], [0], [1], [0, 0, 1, 1], [], []>} : vector<16x96xf32>, vector<96x96xf32>, vector<16x96xf32> -> vector<16x96xf32>
    %c0_13 = arith.constant 0 : index
    %c0_14 = arith.constant 0 : index
    %c0_15 = arith.constant 0 : index
    %19 = vector.load %arg6[%c0_13, %c0_14, %c0_15] : memref<1x1x96xf32, #tpu.memory_space<vmem>>, vector<1x1x96xf32>
    %20 = vector.shape_cast %19 : vector<1x1x96xf32> to vector<1x96xf32>
    %21 = vector.broadcast %20 : vector<1x96xf32> to vector<16x96xf32>
    %22 = arith.addf %18, %21 : vector<16x96xf32>
    %cst_16 = arith.constant 0.000000e+00 : f32
    %23 = vector.broadcast %cst_16 : f32 to vector<16x96xf32>
    %24 = arith.maximumf %22, %23 : vector<16x96xf32>
    %25 = math.absf %22 : vector<16x96xf32>
    %cst_17 = arith.constant 0.000000e+00 : f32
    %26 = vector.broadcast %cst_17 : f32 to vector<16x96xf32>
    %27 = arith.subf %26, %25 : vector<16x96xf32>
    %28 = math.exp %27 : vector<16x96xf32>
    %29 = math.log1p %28 : vector<16x96xf32>
    %30 = arith.addf %24, %29 : vector<16x96xf32>
    %c0_18 = arith.constant 0 : index
    %c0_19 = arith.constant 0 : index
    %c0_20 = arith.constant 0 : index
    %31 = vector.load %arg7[%c0_18, %c0_19, %c0_20] : memref<1x96x128xf32, #tpu.memory_space<vmem>>, vector<1x96x128xf32>
    %32 = vector.shape_cast %31 : vector<1x96x128xf32> to vector<96x128xf32>
    %cst_21 = arith.constant dense<0.000000e+00> : vector<16x128xf32>
    %33 = tpu.matmul %30, %32, %cst_21 {dimension_numbers = #tpu.dot_dimension_numbers<[1], [0], [0], [1], [0, 0, 1, 1], [], []>} : vector<16x96xf32>, vector<96x128xf32>, vector<16x128xf32> -> vector<16x128xf32>
    %c0_22 = arith.constant 0 : index
    %c0_23 = arith.constant 0 : index
    %c0_24 = arith.constant 0 : index
    %34 = vector.load %arg8[%c0_22, %c0_23, %c0_24] : memref<1x1x128xf32, #tpu.memory_space<vmem>>, vector<1x1x128xf32>
    %35 = vector.shape_cast %34 : vector<1x1x128xf32> to vector<1x128xf32>
    %36 = vector.broadcast %35 : vector<1x128xf32> to vector<16x128xf32>
    %37 = arith.addf %33, %36 : vector<16x128xf32>
    %c0_25 = arith.constant 0 : index
    %c0_26 = arith.constant 0 : index
    %38 = vector.load %arg9[%c0_25, %c0_26] : memref<16x128xf32, #tpu.memory_space<vmem>>, vector<16x128xf32>
    tpu.vector_store %arg9[%c0_25, %c0_26], %37 {strides = array<i32>} : memref<16x128xf32, #tpu.memory_space<vmem>>, vector<16x128xf32>,
    return
  }
  func.func @transform_0(%arg0: i32, %arg1: i32) -> (i32, i32) {
    %c0_i32 = arith.constant 0 : i32
    %c0_i32_0 = arith.constant 0 : i32
    return %arg0, %c0_i32 : i32, i32
  }
  func.func @transform_1(%arg0: i32, %arg1: i32) -> (i32, i32, i32) {
    %c0_i32 = arith.constant 0 : i32
    %c0_i32_0 = arith.constant 0 : i32
    %c0_i32_1 = arith.constant 0 : i32
    %c0_i32_2 = arith.constant 0 : i32
    return %c0_i32, %c0_i32_0, %c0_i32_1 : i32, i32, i32
  }
  func.func @transform_2(%arg0: i32, %arg1: i32) -> (i32, i32, i32) {
    %c0_i32 = arith.constant 0 : i32
    %c0_i32_0 = arith.constant 0 : i32
    %c0_i32_1 = arith.constant 0 : i32
    %c0_i32_2 = arith.constant 0 : i32
    return %c0_i32, %c0_i32_0, %c0_i32_1 : i32, i32, i32
  }
  func.func @transform_3(%arg0: i32, %arg1: i32) -> (i32, i32, i32) {
    %c0_i32 = arith.constant 0 : i32
    %c0_i32_0 = arith.constant 0 : i32
    %c0_i32_1 = arith.constant 0 : i32
    %c0_i32_2 = arith.constant 0 : i32
    return %c0_i32, %c0_i32_0, %c0_i32_1 : i32, i32, i32
  }
  func.func @transform_4(%arg0: i32, %arg1: i32) -> (i32, i32, i32) {
    %c0_i32 = arith.constant 0 : i32
    %c0_i32_0 = arith.constant 0 : i32
    %c0_i32_1 = arith.constant 0 : i32
    %c0_i32_2 = arith.constant 0 : i32
    return %c0_i32, %c0_i32_0, %c0_i32_1 : i32, i32, i32
  }
  func.func @transform_5(%arg0: i32, %arg1: i32) -> (i32, i32, i32) {
    %c0_i32 = arith.constant 0 : i32
    %c0_i32_0 = arith.constant 0 : i32
    %c0_i32_1 = arith.constant 0 : i32
    %c0_i32_2 = arith.constant 0 : i32
    return %c0_i32, %c0_i32_0, %c0_i32_1 : i32, i32, i32
  }
  func.func @transform_6(%arg0: i32, %arg1: i32) -> (i32, i32, i32) {
    %c0_i32 = arith.constant 0 : i32
    %c0_i32_0 = arith.constant 0 : i32
    %c0_i32_1 = arith.constant 0 : i32
    %c0_i32_2 = arith.constant 0 : i32
    return %c0_i32, %c0_i32_0, %c0_i32_1 : i32, i32, i32
  }
  func.func @transform_7(%arg0: i32, %arg1: i32) -> (i32, i32) {
    %c0_i32 = arith.constant 0 : i32
    return %arg0, %arg1 : i32, i32
  }
}

</mosaic_0001>

<llo_original>
// kernel: tpu_custom_call.1
$region0: #{tpu_custom_call.1}
  #allocation0 [shape = 'u32[]', space=smem, size = 0x4, offset = 0x4, fixed_abs, tag = 'smem constant byte address 0x4 - core index']
  #allocation1 [shape = 'u32[72,128]{1,0:T(1,128)}', space=vmem, size = 0x9000, scoped, tag = 'internal scratch']
  %s0 = inlined_call_operand.hbm [shape: f32[16,16], index: 0, kind: input, shape index: {}]
  %s1 = inlined_call_operand.hbm [shape: f32[1,16,96], index: 1, kind: input, shape index: {}]
  %s2 = inlined_call_operand.vmem [shape: f32[1,1,96], index: 2, kind: input, shape index: {}]
  %s3 = inlined_call_operand.hbm [shape: f32[1,96,96], index: 3, kind: input, shape index: {}]
  %s4 = inlined_call_operand.vmem [shape: f32[1,1,96], index: 4, kind: input, shape index: {}]
  %s5 = inlined_call_operand.hbm [shape: f32[1,96,128], index: 5, kind: input, shape index: {}]
  %s6 = inlined_call_operand.vmem [shape: f32[1,1,128], index: 6, kind: input, shape index: {}]
  %s7 = inlined_call_operand.hbm [shape: f32[16,128], index: 7, kind: output, shape index: {}]
  %s8 = sld [smem:[#allocation0]]
  $region54: #{tpu_custom_call.1} parent=0
    _
  %s10 = ssub.s32 1, %s8
  %s11 = scalar_select 0, %s10, %s8
  $region1: #{tpu_custom_call.1} parent=0
    #allocation2 [shape = 'u8[8192]{0}', space=vmem, size = 0x2000, scoped, tag = 'input window, operand 0, single buffered']
    #allocation3 [shape = 's32[1]{0}', space=sflag, size = 0x4, scoped, tag = 'scoped memory for tpu_custom_call.1']
    #allocation4 [shape = 's32[1]{0}', space=sflag, size = 0x4, scoped, tag = 'scoped memory for tpu_custom_call.1']
    #allocation5 [shape = 'u8[8192]{0}', space=vmem, size = 0x2000, scoped, tag = 'input window, operand 1, single buffered']
    #allocation6 [shape = 's32[1]{0}', space=sflag, size = 0x4, scoped, tag = 'scoped memory for tpu_custom_call.1']
    #allocation7 [shape = 'u8[49152]{0}', space=vmem, size = 0xc000, scoped, tag = 'input window, operand 3, single buffered']
    #allocation8 [shape = 'u8[49152]{0}', space=vmem, size = 0xc000, scoped, tag = 'input window, operand 5, single buffered']
    #allocation9 [shape = 's32[1]{0}', space=sflag, size = 0x4, scoped, tag = 'scoped memory for tpu_custom_call.1']
    #allocation10 [shape = 'u8[8192]{0}', space=vmem, size = 0x2000, scoped, tag = 'output window, operand 0, single buffered']
    %12 = vsyncpa [#allocation3], 0
    %13 = vsyncpa [#allocation6], 0
    %14 = vsyncpa [#allocation9], 0
    %15 = vsyncpa [#allocation4], 0
    // Predicated region
    $region2: #{tpu_custom_call.1} parent=1 // pred_check
      _
    $region3: #{tpu_custom_call.1} parent=1 // pred_check_branch
      %17 = sbr.rel (0) target = $region5
    $region4: #{tpu_custom_call.1} parent=1 // pred_region
      %19 = vsyncadd [#allocation3], 0
      %s20 = sshll.u32 %s0, 4
      %s21 = int_to_ptr.hbm [resolvable:$true] %s20
      %s22 = sshll.u32 [#allocation2], 4
      %s23 = int_to_ptr.vmem [resolvable:$true] %s22
      %28 = dma.hbm_to_vmem [thread:$0]  %s21, 256, %s23, [#allocation3], 128, 128, 8
    $region5: #{tpu_custom_call.1} parent=1 // pred_fallthru
      _
    // Predicated region
    $region6: #{tpu_custom_call.1} parent=1 // pred_check
      _
    $region7: #{tpu_custom_call.1} parent=1 // pred_check_branch
      %30 = sbr.rel (0) target = $region9
    $region8: #{tpu_custom_call.1} parent=1 // pred_region
      %32 = vsyncadd [#allocation6], 0
      %s33 = sshll.u32 %s1, 4
      %s34 = int_to_ptr.hbm [resolvable:$true] %s33
      %s35 = sshll.u32 [#allocation5], 4
      %s36 = int_to_ptr.vmem [resolvable:$true] %s35
      %41 = dma.hbm_to_vmem [thread:$0]  %s34, 256, %s36, [#allocation6], 128, 128, 8
    $region9: #{tpu_custom_call.1} parent=1 // pred_fallthru
      _
    // Predicated region
    $region10: #{tpu_custom_call.1} parent=1 // pred_check
      _
    $region11: #{tpu_custom_call.1} parent=1 // pred_check_branch
      %43 = sbr.rel (0) target = $region13
    $region12: #{tpu_custom_call.1} parent=1 // pred_region
      _
    $region13: #{tpu_custom_call.1} parent=1 // pred_fallthru
      _
    // Predicated region
    $region14: #{tpu_custom_call.1} parent=1 // pred_check
      _
    $region15: #{tpu_custom_call.1} parent=1 // pred_check_branch
      %45 = sbr.rel (0) target = $region17
    $region16: #{tpu_custom_call.1} parent=1 // pred_region
      %47 = vsyncadd [#allocation6], 0
      %s48 = sshll.u32 %s3, 4
      %s49 = int_to_ptr.hbm [resolvable:$true] %s48
      %s50 = sshll.u32 [#allocation7], 4
      %s51 = int_to_ptr.vmem [resolvable:$true] %s50
      %56 = dma.hbm_to_vmem [thread:$0]  %s49, 1536, %s51, [#allocation6], 128, 128, 8
    $region17: #{tpu_custom_call.1} parent=1 // pred_fallthru
      _
    // Predicated region
    $region18: #{tpu_custom_call.1} parent=1 // pred_check
      _
    $region19: #{tpu_custom_call.1} parent=1 // pred_check_branch
      %58 = sbr.rel (0) target = $region21
    $region20: #{tpu_custom_call.1} parent=1 // pred_region
      _
    $region21: #{tpu_custom_call.1} parent=1 // pred_fallthru
      _
    // Predicated region
    $region22: #{tpu_custom_call.1} parent=1 // pred_check
      _
    $region23: #{tpu_custom_call.1} parent=1 // pred_check_branch
      %60 = sbr.rel (0) target = $region25
    $region24: #{tpu_custom_call.1} parent=1 // pred_region
      %62 = vsyncadd [#allocation9], 0
      %s63 = sshll.u32 %s5, 4
      %s64 = int_to_ptr.hbm [resolvable:$true] %s63
      %s65 = sshll.u32 [#allocation8], 4
      %s66 = int_to_ptr.vmem [resolvable:$true] %s65
      %71 = dma.hbm_to_vmem [thread:$0]  %s64, 1536, %s66, [#allocation9], 128, 128, 8
    $region25: #{tpu_custom_call.1} parent=1 // pred_fallthru
      _
    // Predicated region
    $region26: #{tpu_custom_call.1} parent=1 // pred_check
      _
    $region27: #{tpu_custom_call.1} parent=1 // pred_check_branch
      %73 = sbr.rel (0) target = $region29
    $region28: #{tpu_custom_call.1} parent=1 // pred_region
      _
    $region29: #{tpu_custom_call.1} parent=1 // pred_fallthru
      _
    // Predicated region
    $region30: #{tpu_custom_call.1} parent=1 // pred_check
      _
    $region31: #{tpu_custom_call.1} parent=1 // pred_check_branch
      %75 = sbr.rel (0) target = $region33
    $region32: #{tpu_custom_call.1} parent=1 // pred_region
      %77 = dma.done [#allocation3], 256
    $region33: #{tpu_custom_call.1} parent=1 // pred_fallthru
      _
    // Predicated region
    $region34: #{tpu_custom_call.1} parent=1 // pred_check
      _
    $region35: #{tpu_custom_call.1} parent=1 // pred_check_branch
      %79 = sbr.rel (0) target = $region37
    $region36: #{tpu_custom_call.1} parent=1 // pred_region
      %81 = dma.done [#allocation6], 256
    $region37: #{tpu_custom_call.1} parent=1 // pred_fallthru
      _
    // Predicated region
    $region38: #{tpu_custom_call.1} parent=1 // pred_check
      _
    $region39: #{tpu_custom_call.1} parent=1 // pred_check_branch
      %83 = sbr.rel (0) target = $region41
    $region40: #{tpu_custom_call.1} parent=1 // pred_region
      %85 = dma.done [#allocation6], 1536
    $region41: #{tpu_custom_call.1} parent=1 // pred_fallthru
      _
    // Predicated region
    $region42: #{tpu_custom_call.1} parent=1 // pred_check
      _
    $region43: #{tpu_custom_call.1} parent=1 // pred_check_branch
      %87 = sbr.rel (0) target = $region45
    $region44: #{tpu_custom_call.1} parent=1 // pred_region
      %89 = dma.done [#allocation9], 1536
    $region45: #{tpu_custom_call.1} parent=1 // pred_fallthru
      _
    %v90 = vld [vmem:[#allocation2] sm:$0xff]
    %v91 = vld [vmem:[#allocation2 + $0x8] sm:$0xff]
    %v92 = vld [vmem:[#allocation5] sm:$0xff]
    %v93 = vld [vmem:[#allocation5 + $0x8] sm:$0xff]
    %v94 = vld [vmem:[%s2] sm:$0x1]
    %v96 = vperm.slane %v94, 0
    %vm98 = vcmask 130048
    %v100 = vsel %vm98, %v90, 0
    %v103 = vsel %vm98, %v91, 0
    %105 = vmatpush.msra.mxu0 0.0
    %106 = vmatpush.msra.mxu0 0.0
    %107 = vmatpush.msra.mxu0 0.0
    %108 = vmatpush.msra.mxu0 0.0
    %109 = vmatpush.msra.mxu0 0.0
    %110 = vmatpush.msra.mxu0 0.0
    %111 = vmatpush.msra.mxu0 0.0
    %112 = vmatpush.msra.mxu0 0.0
    %113 = vmatpush.msra.mxu0 0.0
    %114 = vmatpush.msra.mxu0 0.0
    %115 = vmatpush.msra.mxu0 0.0
    %116 = vmatpush.msra.mxu0 0.0
    %117 = vmatpush.msra.mxu0 0.0
    %118 = vmatpush.msra.mxu0 0.0
    %119 = vmatpush.msra.mxu0 %v93
    %120 = vmatpush.msra.mxu0 %v92
    %121 = vmatmul.f32.gmra.mxu0 %v100
    %v122 = vpop.f32.mrf.mxu0
    %v123 = vadd.f32 %v96, %v122
    %124 = vmatmul.f32.gmra.mxu0 %v103
    %v125 = vpop.f32.mrf.mxu0
    %v126 = vadd.f32 %v96, %v125
    %127 = vdwg.mxu0
    %v128 = vmax.f32 %v123, 0.0
    %v129 = vmax.f32 %v126, 0.0
    %v130 = vand.u32 2147483647, %v123
    %v131 = vand.u32 2147483647, %v126
    %v132 = vsub.f32 0.0, %v130
    %v133 = vsub.f32 0.0, %v131
    %v134 = vmul.f32 %v132, 1.442695
    %v135 = vpow.pop %v134
    %v136 = vmul.f32 %v133, 1.442695
    %v137 = vpow.pop %v136
    %v138 = vadd.f32 %v135, 1.0
    %v139 = vlog2.pop %v138
    %v140 = vmul.f32 %v139, 0.6931472
    %v141 = vmul.f32 -0.5, %v135
    %v142 = vadd.f32 %v141, 1.0
    %v143 = vmul.f32 %v142, %v135
    %v144 = vand.u32 2147483647, %v135
    %vm145 = vcmp.lt.f32.partialorder %v144, 0.0004427343
    %v146 = vsel %vm145, %v143, %v140
    %v147 = vadd.f32 %v137, 1.0
    %v148 = vlog2.pop %v147
    %v149 = vmul.f32 %v148, 0.6931472
    %v150 = vmul.f32 -0.5, %v137
    %v151 = vadd.f32 %v150, 1.0
    %v152 = vmul.f32 %v151, %v137
    %v153 = vand.u32 2147483647, %v137
    %vm154 = vcmp.lt.f32.partialorder %v153, 0.0004427343
    %v155 = vsel %vm154, %v152, %v149
    %v156 = vadd.f32 %v128, %v146
    %v157 = vadd.f32 %v129, %v155
    %v158 = vld [vmem:[#allocation7] sm:$0xff]
    %v159 = vld [vmem:[#allocation7 + $0x8] sm:$0xff]
    %v160 = vld [vmem:[#allocation7 + $0x10] sm:$0xff]
    %v161 = vld [vmem:[#allocation7 + $0x18] sm:$0xff]
    %v162 = vld [vmem:[#allocation7 + $0x20] sm:$0xff]
    %v163 = vld [vmem:[#allocation7 + $0x28] sm:$0xff]
    %v164 = vld [vmem:[#allocation7 + $0x30] sm:$0xff]
    %v165 = vld [vmem:[#allocation7 + $0x38] sm:$0xff]
    %v166 = vld [vmem:[#allocation7 + $0x40] sm:$0xff]
    %v167 = vld [vmem:[#allocation7 + $0x48] sm:$0xff]
    %v168 = vld [vmem:[#allocation7 + $0x50] sm:$0xff]
    %v169 = vld [vmem:[#allocation7 + $0x58] sm:$0xff]
    %v170 = vld [vmem:[%s4] sm:$0x1]
    %v172 = vperm.slane %v170, 0
    %vm174 = vcmask 785408
    %v176 = vsel %vm174, %v156, 0
    %v179 = vsel %vm174, %v157, 0
    %181 = vmatpush.msra.mxu0 0.0
    %182 = vmatpush.msra.mxu0 0.0
    %183 = vmatpush.msra.mxu0 0.0
    %184 = vmatpush.msra.mxu0 0.0
    %185 = vmatpush.msra.mxu0 %v169
    %186 = vmatpush.msra.mxu0 %v168
    %187 = vmatpush.msra.mxu0 %v167
    %188 = vmatpush.msra.mxu0 %v166
    %189 = vmatpush.msra.mxu0 %v165
    %190 = vmatpush.msra.mxu0 %v164
    %191 = vmatpush.msra.mxu0 %v163
    %192 = vmatpush.msra.mxu0 %v162
    %193 = vmatpush.msra.mxu0 %v161
    %194 = vmatpush.msra.mxu0 %v160
    %195 = vmatpush.msra.mxu0 %v159
    %196 = vmatpush.msra.mxu0 %v158
    %197 = vmatmul.f32.gmra.mxu0 %v176
    %v198 = vpop.f32.mrf.mxu0
    %v199 = vadd.f32 %v172, %v198
    %200 = vmatmul.f32.gmra.mxu0 %v179
    %v201 = vpop.f32.mrf.mxu0
    %v202 = vadd.f32 %v172, %v201
    %203 = vdwg.mxu0
    %v204 = vmax.f32 %v199, 0.0
    %v205 = vmax.f32 %v202, 0.0
    %v206 = vand.u32 2147483647, %v199
    %v207 = vand.u32 2147483647, %v202
    %v208 = vsub.f32 0.0, %v206
    %v209 = vsub.f32 0.0, %v207
    %v210 = vmul.f32 %v208, 1.442695
    %v211 = vpow.pop %v210
    %v212 = vmul.f32 %v209, 1.442695
    %v213 = vpow.pop %v212
    %v214 = vadd.f32 %v211, 1.0
    %v215 = vlog2.pop %v214
    %v216 = vmul.f32 %v215, 0.6931472
    %v217 = vmul.f32 -0.5, %v211
    %v218 = vadd.f32 %v217, 1.0
    %v219 = vmul.f32 %v218, %v211
    %v220 = vand.u32 2147483647, %v211
    %vm221 = vcmp.lt.f32.partialorder %v220, 0.0004427343
    %v222 = vsel %vm221, %v219, %v216
    %v223 = vadd.f32 %v213, 1.0
    %v224 = vlog2.pop %v223
    %v225 = vmul.f32 %v224, 0.6931472
    %v226 = vmul.f32 -0.5, %v213
    %v227 = vadd.f32 %v226, 1.0
    %v228 = vmul.f32 %v227, %v213
    %v229 = vand.u32 2147483647, %v213
    %vm230 = vcmp.lt.f32.partialorder %v229, 0.0004427343
    %v231 = vsel %vm230, %v228, %v225
    %v232 = vadd.f32 %v204, %v222
    %v233 = vadd.f32 %v205, %v231
    %v234 = vld [vmem:[#allocation8] sm:$0xff]
    %v235 = vld [vmem:[#allocation8 + $0x8] sm:$0xff]
    %v236 = vld [vmem:[#allocation8 + $0x10] sm:$0xff]
    %v237 = vld [vmem:[#allocation8 + $0x18] sm:$0xff]
    %v238 = vld [vmem:[#allocation8 + $0x20] sm:$0xff]
    %v239 = vld [vmem:[#allocation8 + $0x28] sm:$0xff]
    %v240 = vld [vmem:[#allocation8 + $0x30] sm:$0xff]
    %v241 = vld [vmem:[#allocation8 + $0x38] sm:$0xff]
    %v242 = vld [vmem:[#allocation8 + $0x40] sm:$0xff]
    %v243 = vld [vmem:[#allocation8 + $0x48] sm:$0xff]
    %v244 = vld [vmem:[#allocation8 + $0x50] sm:$0xff]
    %v245 = vld [vmem:[#allocation8 + $0x58] sm:$0xff]
    %v246 = vld [vmem:[%s6] sm:$0x1]
    %v248 = vperm.slane %v246, 0
    %v251 = vsel %vm174, %v232, 0
    %v254 = vsel %vm174, %v233, 0
    %256 = vmatpush.msra.mxu0 0.0
    %257 = vmatpush.msra.mxu0 0.0
    %258 = vmatpush.msra.mxu0 0.0
    %259 = vmatpush.msra.mxu0 0.0
    %260 = vmatpush.msra.mxu0 %v245
    %261 = vmatpush.msra.mxu0 %v244
    %262 = vmatpush.msra.mxu0 %v243
    %263 = vmatpush.msra.mxu0 %v242
    %264 = vmatpush.msra.mxu0 %v241
    %265 = vmatpush.msra.mxu0 %v240
    %266 = vmatpush.msra.mxu0 %v239
    %267 = vmatpush.msra.mxu0 %v238
    %268 = vmatpush.msra.mxu0 %v237
    %269 = vmatpush.msra.mxu0 %v236
    %270 = vmatpush.msra.mxu0 %v235
    %271 = vmatpush.msra.mxu0 %v234
    %272 = vmatmul.f32.gmra.mxu0 %v251
    %v273 = vpop.f32.mrf.mxu0
    %v274 = vadd.f32 %v248, %v273
    %275 = vmatmul.f32.gmra.mxu0 %v254
    %v276 = vpop.f32.mrf.mxu0
    %v277 = vadd.f32 %v248, %v276
    %278 = vdwg.mxu0
    %279 = vst [vmem:[#allocation10] sm:$0xff] %v274
    %280 = vst [vmem:[#allocation10 + $0x8] sm:$0xff] %v277
    // Predicated region
    $region46: #{tpu_custom_call.1} parent=1 // pred_check
      _
    $region47: #{tpu_custom_call.1} parent=1 // pred_check_branch
      %282 = sbr.rel (0) target = $region49
    $region48: #{tpu_custom_call.1} parent=1 // pred_region
      %284 = vsyncadd [#allocation4], 0
      %s285 = sshll.u32 [#allocation10], 4
      %s286 = int_to_ptr.vmem [resolvable:$true] %s285
      %s287 = sshll.u32 %s7, 4
      %s288 = int_to_ptr.hbm [resolvable:$true] %s287
      %293 = dma.vmem_to_hbm [thread:$0]  %s286, 256, %s288, [#allocation4], 128, 128, 8
    $region49: #{tpu_custom_call.1} parent=1 // pred_fallthru
      _
    // Predicated region
    $region50: #{tpu_custom_call.1} parent=1 // pred_check
      _
    $region51: #{tpu_custom_call.1} parent=1 // pred_check_branch
      %295 = sbr.rel (0) target = $region53
    $region52: #{tpu_custom_call.1} parent=1 // pred_region
      %297 = dma.done [#allocation4], 256
    $region53: #{tpu_custom_call.1} parent=1 // pred_fallthru
      _
    %298 = vsyncpa [#allocation3], 1
    %299 = vsyncpa [#allocation6], 1
    %300 = vsyncpa [#allocation9], 1
    %301 = vsyncpa [#allocation4], 1

</llo_original>
